<compile_context>
chip_gen: v7x
topology: tpu7x:2x2x1
jax: 0.10.0
libtpu: 0.0.40
codegen_flags: <defaults>
</compile_context>

<pallas_src>
import functools
import math

import jax
import jax.numpy as jnp
from jax import lax
from jax.experimental import pallas as pl
from jax.experimental.pallas import tpu as pltpu


def _pick_tile(full, want, align):
    """Largest `align`-aligned tile <= `want` that evenly divides `full`
    (falls back to the full extent for small / indivisible dims)."""
    if full <= want:
        return full
    t = (want // align) * align
    while t >= align:
        if full % t == 0:
            return t
        t -= align
    return full


# ----------------------------------------------------------------------------
# Kernel 1: batched Q/K/V linear projections, tiled & pipelined
#   grid = (3 projections, row tiles, output-column tiles)
# ----------------------------------------------------------------------------
def _qkv_proj_kernel(x_ref, w_ref, b_ref, o_ref):
    # x: [1, TM, D] bf16   w: [1, D, TN] bf16   b: [1, 1, TN] f32   o: [1, TM, TN] bf16
    acc = jnp.dot(x_ref[0], w_ref[0], preferred_element_type=jnp.float32)
    o_ref[0] = (acc + b_ref[0]).astype(o_ref.dtype)


def _qkv_projection(x_stack, w_stack, b_stack, *, tm, tn):
    P, M, D = x_stack.shape
    grid = (P, M // tm, D // tn)
    return pl.pallas_call(
        _qkv_proj_kernel,
        grid=grid,
        out_shape=jax.ShapeDtypeStruct((P, M, D), jnp.bfloat16),
        in_specs=[
            # x tile is constant in j -> stays resident across column tiles.
            pl.BlockSpec((1, tm, D), lambda p, i, j: (p, i, 0)),
            pl.BlockSpec((1, D, tn), lambda p, i, j: (p, 0, j)),
            pl.BlockSpec((1, 1, tn), lambda p, i, j: (p, 0, j)),
        ],
        out_specs=pl.BlockSpec((1, tm, tn), lambda p, i, j: (p, i, j)),
        compiler_params=pltpu.CompilerParams(
            dimension_semantics=("parallel", "parallel", "parallel")),
    )(x_stack, w_stack, b_stack)


# ----------------------------------------------------------------------------
# Kernel 2: scaled dot-product attention, a block of heads per grid step
# ----------------------------------------------------------------------------
def _attn_kernel(q_ref, k_ref, v_ref, ctx_ref, *attn_refs, scale):
    # q/k/v: [HB, L, d] bf16 blocks of the (torch-quirk) head-split projections.
    # Fold the scale into q: [HB,L,d] multiply instead of [HB,L,L].
    q = (q_ref[...].astype(jnp.float32) * scale).astype(jnp.bfloat16)
    k = k_ref[...]
    v = v_ref[...]
    # Batched q @ k^T over the head axis; no explicit transpose (MXU direct).
    s = lax.dot_general(q, k, (((2,), (2,)), ((0,), (0,))),
                        preferred_element_type=jnp.float32)          # [HB, L, L]
    m = jnp.max(s, axis=-1, keepdims=True)
    p = jnp.exp(s - m)
    denom = jnp.sum(p, axis=-1, keepdims=True)
    p = p * pl.reciprocal(denom, approx=True)                        # softmax(dim=-1)
    if attn_refs:                                                    # optional output
        attn_refs[0][...] = p
    ctx_ref[...] = lax.dot_general(p.astype(jnp.bfloat16), v,
                                   (((2,), (1,)), ((0,), (0,))),
                                   preferred_element_type=jnp.float32)  # [HB, L, d]


def _attention(q, k, v, *, scale, block_heads, return_attention):
    BH, L, d = q.shape
    hb = block_heads
    grid = (BH // hb,)
    ctx_shape = jax.ShapeDtypeStruct((BH, L, d), jnp.float32)
    ctx_spec = pl.BlockSpec((hb, L, d), lambda i: (i, 0, 0))
    if return_attention:
        out_shape = (ctx_shape, jax.ShapeDtypeStruct((BH, L, L), jnp.float32))
        out_specs = (ctx_spec, pl.BlockSpec((hb, L, L), lambda i: (i, 0, 0)))
    else:
        out_shape = ctx_shape
        out_specs = ctx_spec
    result = pl.pallas_call(
        functools.partial(_attn_kernel, scale=scale),
        grid=grid,
        out_shape=out_shape,
        in_specs=[pl.BlockSpec((hb, L, d), lambda i: (i, 0, 0))] * 3,
        out_specs=out_specs,
        compiler_params=pltpu.CompilerParams(dimension_semantics=("parallel",)),
    )(q, k, v)
    if return_attention:
        return result
    return result, None


# ----------------------------------------------------------------------------
# Kernel 3: final linear + residual add + LayerNorm (fused, row-tiled)
# ----------------------------------------------------------------------------
def _final_kernel(ctx_ref, res_ref, w_ref, b_ref, g_ref, beta_ref, out_ref, *, eps):
    # ctx/res: [TM, D] ; w: [D, D] bf16 (VMEM-resident across the row grid)
    y = jnp.dot(ctx_ref[...].astype(jnp.bfloat16), w_ref[...],
                preferred_element_type=jnp.float32) + b_ref[...]
    y = res_ref[...] + y
    mean = jnp.mean(y, axis=-1, keepdims=True)
    var = jnp.mean(jnp.square(y - mean), axis=-1, keepdims=True)
    yn = (y - mean) * lax.rsqrt(var + eps)
    out_ref[...] = yn * g_ref[...] + beta_ref[...]


def _final_proj_ln(ctx2d, res2d, w, b, g, beta, *, tm, eps=1e-5):
    M, D = ctx2d.shape
    grid = (M // tm,)
    return pl.pallas_call(
        functools.partial(_final_kernel, eps=eps),
        grid=grid,
        out_shape=jax.ShapeDtypeStruct((M, D), jnp.float32),
        in_specs=[
            pl.BlockSpec((tm, D), lambda i: (i, 0)),
            pl.BlockSpec((tm, D), lambda i: (i, 0)),
            pl.BlockSpec((D, D), lambda i: (0, 0)),   # weight resident across rows
            pl.BlockSpec((1, D), lambda i: (0, 0)),
            pl.BlockSpec((1, D), lambda i: (0, 0)),
            pl.BlockSpec((1, D), lambda i: (0, 0)),
        ],
        out_specs=pl.BlockSpec((tm, D), lambda i: (i, 0)),
        compiler_params=pltpu.CompilerParams(dimension_semantics=("parallel",)),
    )(ctx2d, res2d, w, b, g, beta)


# ----------------------------------------------------------------------------
# Wrapper
# ----------------------------------------------------------------------------
def multi_head_attention(key, value, query, params, *, num_heads,
                         return_attention=True):
    B, L, D = key.shape
    dim_per_head = D // num_heads
    BH = B * num_heads
    M = B * L

    # Tile sizes: demo shapes collapse to a single tile; for realistic D these
    # keep (x tile + weight tile) bf16 double-buffered well under the 32 MiB
    # default scoped-VMEM budget (also fits v7x's 64 MiB physical VMEM).
    tm = _pick_tile(M, 256, 8)
    tn = _pick_tile(D, 256, 128)
    hb = _pick_tile(BH, 16, 1)

    # bf16 copies of activations / matmul weights (MXU inputs, half the HBM
    # traffic); biases / LayerNorm params stay f32 (VPU math in f32).
    x_stack = jnp.stack([key.reshape(M, D), value.reshape(M, D),
                         query.reshape(M, D)]).astype(jnp.bfloat16)
    w_stack = jnp.stack([params["wk"], params["wv"],
                         params["wq"]]).astype(jnp.bfloat16)
    b_stack = jnp.stack([params["bk"], params["bv"], params["bq"]])

    proj = _qkv_projection(x_stack, w_stack, b_stack, tm=tm, tn=tn)  # [3, M, D] bf16

    # --- torch-style .view(B*H, -1, d) head split (row-major reshape, glue) --
    k = proj[0].reshape(BH, L, dim_per_head)
    v = proj[1].reshape(BH, L, dim_per_head)
    q = proj[2].reshape(BH, L, dim_per_head)

    # Scale exactly as in the reference module: after the view,
    # key.size(-1) == dim_per_head, so scale = (dim_per_head // num_heads)**-0.5
    # (integer floor division; torch quirk preserved on purpose).
    scale = float((dim_per_head // num_heads) ** (-0.5))

    context, attention = _attention(q, k, v, scale=scale, block_heads=hb,
                                    return_attention=return_attention)

    # --- merge heads, final linear + residual + LayerNorm (fused kernel) ----
    ctx2d = context.reshape(M, D)
    res2d = query.reshape(M, D)          # residual is the *pre-projection* query
    out2d = _final_proj_ln(ctx2d, res2d,
                           params["wf"].astype(jnp.bfloat16), params["bf"],
                           params["ln_g"], params["ln_b"], tm=tm)
    return out2d.reshape(B, L, D), attention


# ----------------------------------------------------------------------------
# Pure-JAX f32 reference (mirrors the PyTorch forward 1:1) for correctness
# ----------------------------------------------------------------------------
def reference(key, value, query, params, *, num_heads):
    B, L, D = key.shape
    d = D // num_heads
    k = key @ params["wk"] + params["bk"]
    v = value @ params["wv"] + params["bv"]
    q = query @ params["wq"] + params["bq"]
    k = k.reshape(B * num_heads, -1, d)
    v = v.reshape(B * num_heads, -1, d)
    q = q.reshape(B * num_heads, -1, d)
    scale = (d // num_heads) ** (-0.5)
    s = jnp.einsum("bld,bmd->blm", q, k) * scale
    attn = jax.nn.softmax(s, axis=-1)
    ctx = jnp.einsum("blm,bmd->bld", attn, v)
    ctx = ctx.reshape(B, -1, d * num_heads)
    out = ctx @ params["wf"] + params["bf"]
    y = query + out
    mean = jnp.mean(y, axis=-1, keepdims=True)
    var = jnp.mean((y - mean) ** 2, axis=-1, keepdims=True)
    y = (y - mean) / jnp.sqrt(var + 1e-5)
    return y * params["ln_g"] + params["ln_b"], attn


# ----------------------------------------------------------------------------
if __name__ == "__main__":
    B, L, model_dim, num_heads = 2, 8, 32, 4

    root = jax.random.PRNGKey(0)
    keys = jax.random.split(root, 12)
    bound = 1.0 / math.sqrt(model_dim)

    def w(k):  # weight stored as [D_in, D_out]
        return jax.random.uniform(k, (model_dim, model_dim), jnp.float32, -bound, bound)

    def b(k):
        return jax.random.uniform(k, (1, model_dim), jnp.float32, -bound, bound)

    params = {
        "wk": w(keys[0]), "bk": b(keys[1]),
        "wv": w(keys[2]), "bv": b(keys[3]),
        "wq": w(keys[4]), "bq": b(keys[5]),
        "wf": w(keys[6]), "bf": b(keys[7]),
        "ln_g": jnp.ones((1, model_dim), jnp.float32),   # nn.LayerNorm default init
        "ln_b": jnp.zeros((1, model_dim), jnp.float32),
    }

    key_in = jax.random.normal(keys[8], (B, L, model_dim), jnp.float32)
    value_in = jax.random.normal(keys[9], (B, L, model_dim), jnp.float32)
    query_in = jax.random.normal(keys[10], (B, L, model_dim), jnp.float32)

    out, attn = multi_head_attention(key_in, value_in, query_in, params,
                                     num_heads=num_heads)
    jax.block_until_ready((out, attn))

    out_ref, attn_ref = reference(key_in, value_in, query_in, params,
                                  num_heads=num_heads)
    assert out.shape == (B, L, model_dim)
    assert attn.shape == (B * num_heads, L, L)
    # bf16 MXU matmuls + approx reciprocal vs f32 reference -> ~1% tolerance.
    assert jnp.allclose(out, out_ref, atol=5e-2, rtol=5e-2)
    assert jnp.allclose(attn, attn_ref, atol=2e-2, rtol=2e-2)

    print("KERNEL_OK")
</pallas_src>

<mosaic_0001>
module attributes {stable_mosaic.version = 11 : i64} {
  func.func @_qkv_proj_kernel(%arg0: i32, %arg1: i32, %arg2: i32, %arg3: memref<1x16x32xbf16, #tpu.memory_space<vmem>>, %arg4: memref<1x32x32xbf16, #tpu.memory_space<vmem>>, %arg5: memref<1x1x32xf32, #tpu.memory_space<vmem>>, %arg6: memref<1x16x32xbf16, #tpu.memory_space<vmem>>) attributes {dimension_semantics = [#tpu.dimension_semantics<parallel>, #tpu.dimension_semantics<parallel>, #tpu.dimension_semantics<parallel>], iteration_bounds = array<i64: 3, 1, 1>, scalar_prefetch = 0 : i64, scratch_operands = 0 : i64, tpu.core_type = #tpu.core_type<tc>, window_params = [{transform_indices = @transform_0, window_bounds = array<i64: 1, 16, 32>}, {transform_indices = @transform_1, window_bounds = array<i64: 1, 32, 32>}, {transform_indices = @transform_2, window_bounds = array<i64: 1, 1, 32>}, {transform_indices = @transform_3, window_bounds = array<i64: 1, 16, 32>}]} {
    %c0 = arith.constant 0 : index
    %c0_0 = arith.constant 0 : index
    %c0_1 = arith.constant 0 : index
    %0 = vector.load %arg3[%c0, %c0_0, %c0_1] : memref<1x16x32xbf16, #tpu.memory_space<vmem>>, vector<1x16x32xbf16>
    %1 = vector.shape_cast %0 : vector<1x16x32xbf16> to vector<16x32xbf16>
    %c0_2 = arith.constant 0 : index
    %c0_3 = arith.constant 0 : index
    %c0_4 = arith.constant 0 : index
    %2 = vector.load %arg4[%c0_2, %c0_3, %c0_4] : memref<1x32x32xbf16, #tpu.memory_space<vmem>>, vector<1x32x32xbf16>
    %3 = vector.shape_cast %2 : vector<1x32x32xbf16> to vector<32x32xbf16>
    %cst = arith.constant dense<0.000000e+00> : vector<16x32xf32>
    %4 = tpu.matmul %1, %3, %cst {dimension_numbers = #tpu.dot_dimension_numbers<[1], [0], [0], [1], [0, 0, 1, 1], [], []>} : vector<16x32xbf16>, vector<32x32xbf16>, vector<16x32xf32> -> vector<16x32xf32>
    %c0_5 = arith.constant 0 : index
    %c0_6 = arith.constant 0 : index
    %c0_7 = arith.constant 0 : index
    %5 = vector.load %arg5[%c0_5, %c0_6, %c0_7] : memref<1x1x32xf32, #tpu.memory_space<vmem>>, vector<1x1x32xf32>
    %6 = vector.shape_cast %5 : vector<1x1x32xf32> to vector<1x32xf32>
    %7 = vector.broadcast %6 : vector<1x32xf32> to vector<16x32xf32>
    %8 = arith.addf %4, %7 : vector<16x32xf32>
    %9 = arith.truncf %8 : vector<16x32xf32> to vector<16x32xbf16>
    %c0_8 = arith.constant 0 : index
    %c0_9 = arith.constant 0 : index
    %c0_10 = arith.constant 0 : index
    %10 = vector.load %arg6[%c0_8, %c0_9, %c0_10] : memref<1x16x32xbf16, #tpu.memory_space<vmem>>, vector<1x16x32xbf16>
    %11 = vector.shape_cast %10 : vector<1x16x32xbf16> to vector<16x32xbf16>
    %12 = vector.shape_cast %9 : vector<16x32xbf16> to vector<1x16x32xbf16>
    tpu.vector_store %arg6[%c0_8, %c0_9, %c0_10], %12 {strides = array<i32>} : memref<1x16x32xbf16, #tpu.memory_space<vmem>>, vector<1x16x32xbf16>,
    return
  }
  func.func @transform_0(%arg0: i32, %arg1: i32, %arg2: i32) -> (i32, i32, i32) {
    %c0_i32 = arith.constant 0 : i32
    %c0_i32_0 = arith.constant 0 : i32
    return %arg0, %arg1, %c0_i32 : i32, i32, i32
  }
  func.func @transform_1(%arg0: i32, %arg1: i32, %arg2: i32) -> (i32, i32, i32) {
    %c0_i32 = arith.constant 0 : i32
    %c0_i32_0 = arith.constant 0 : i32
    return %arg0, %c0_i32, %arg2 : i32, i32, i32
  }
  func.func @transform_2(%arg0: i32, %arg1: i32, %arg2: i32) -> (i32, i32, i32) {
    %c0_i32 = arith.constant 0 : i32
    %c0_i32_0 = arith.constant 0 : i32
    return %arg0, %c0_i32, %arg2 : i32, i32, i32
  }
  func.func @transform_3(%arg0: i32, %arg1: i32, %arg2: i32) -> (i32, i32, i32) {
    %c0_i32 = arith.constant 0 : i32
    return %arg0, %arg1, %arg2 : i32, i32, i32
  }
}

</mosaic_0001>

<llo_original>
// kernel: tpu_custom_call.1
$region0: #{tpu_custom_call.1}
  #allocation0 [shape = 'u32[]', space=smem, size = 0x4, offset = 0x4, fixed_abs, tag = 'smem constant byte address 0x4 - core index']
  #allocation1 [shape = 'u32[144,128]{1,0:T(1,128)}', space=vmem, size = 0x12000, scoped, tag = 'internal scratch']
  %s0 = inlined_call_operand.hbm [shape: bf16[3,16,32], index: 0, kind: input, shape index: {}]
  %s1 = inlined_call_operand.hbm [shape: bf16[3,32,32], index: 1, kind: input, shape index: {}]
  %s2 = inlined_call_operand.vmem [shape: f32[3,1,32], index: 2, kind: input, shape index: {}]
  %s3 = inlined_call_operand.hbm [shape: bf16[3,16,32], index: 3, kind: output, shape index: {}]
  %s4 = sld [smem:[#allocation0]]
  $region53: #{tpu_custom_call.1} parent=0
    _
  %s6 = ssub.s32 1, %s4
  %s7 = scalar_select 0, %s6, %s4
  $region1: #{tpu_custom_call.1} parent=0
    #allocation2 [shape = 'u8[8192]{0}', space=vmem, size = 0x2000, scoped, tag = 'input window, operand 0']
    #allocation3 [shape = 's32[2]{0}', space=sflag, size = 0x8, scoped, tag = 'scoped memory for tpu_custom_call.1']
    #allocation4 [shape = 's32[2]{0}', space=sflag, size = 0x8, scoped, tag = 'scoped memory for tpu_custom_call.1']
    #allocation5 [shape = 'u8[16384]{0}', space=vmem, size = 0x4000, scoped, tag = 'input window, operand 1']
    #allocation6 [shape = 's32[2]{0}', space=sflag, size = 0x8, scoped, tag = 'scoped memory for tpu_custom_call.1']
    #allocation7 [shape = 'u8[8192]{0}', space=vmem, size = 0x2000, scoped, tag = 'output window, operand 0']
    %8 = vsyncpa [#allocation3], 0
    %s9 = scalar_lea.sflag [#allocation3], 1
    %10 = vsyncpa %s9, 0
    %11 = vsyncpa [#allocation6], 0
    %s12 = scalar_lea.sflag [#allocation6], 1
    %13 = vsyncpa %s12, 0
    %14 = vsyncpa [#allocation4], 0
    %s15 = scalar_lea.sflag [#allocation4], 1
    %16 = vsyncpa %s15, 0
    loop: start=0, step=1, limit=5
    $region2: #{tpu_custom_call.1} parent=1 // loop_pre_header
      _
    $region3: #{tpu_custom_call.1} parent=1 // loop_header
      %s18 = sphi 0, %s22
      %p19 = scmp.ge.s32.totalorder %s18, 5
      %s25 = sphi 0, %s44
      %s26 = sphi 0, %s40
      %s27 = sphi 0, %s36
      %s28 = sphi 0, %s25
      %s29 = sphi 0, %s26
      %s30 = sphi 0, %s27
      %s31 = sphi 0, %s28
      %s32 = sphi 0, %s29
      %s33 = sphi 0, %s30
      %s49 = sphi 0, %s51
      %s52 = sphi 0, %s49
      %s53 = sphi 0, %s52
      %s69 = sphi 0, %s53
      %s77 = sphi 0, %s79
      %s80 = sphi 0, %s77
      %s81 = sphi 0, %s80
      %s97 = sphi 0, %s81
      %s105 = sphi 0, %s107
      %s108 = sphi 0, %s105
      %s109 = sphi 0, %s108
      %s125 = sphi 0, %s109
      %s135 = sphi 0, %s137
      %s138 = sphi 0, %s135
      %s139 = sphi 0, %s138
      %s155 = sphi 0, %s139
    $region4: #{tpu_custom_call.1} parent=1 // loop_header_branch
      %21 = sbr.rel (%p19) target = $region8
    $region5: #{tpu_custom_call.1} parent=1 // loop_body
      %s23 = ssub.s32 %s18, 1
      %s24 = ssub.s32 %s18, 2
      %s34 = sadd.s32 1, %s27
      %p35 = scmp.ge.s32.totalorder %s34, 1
      %s36 = scalar_select %p35, 0, %s34
      %s37 = sadd.s32 1, %s26
      %s38 = scalar_select %p35, %s37, %s26
      %p39 = scmp.ge.s32.totalorder %s38, 1
      %s40 = scalar_select %p39, 0, %s38
      %s41 = sadd.s32 1, %s25
      %s42 = scalar_select %p39, %s41, %s25
      %p43 = scmp.ge.s32.totalorder %s42, 3
      %s44 = scalar_select %p43, 0, %s42
      %s45 = ssub.s32 %s25, %s44
      %s46 = ssub.s32 %s26, %s40
      %s47 = sor.u32 %s45, %s46
      %p48 = scmp.eq.s32.totalorder %s47, 0
      %s50 = sadd.s32 %s49, 1
      %s51 = scalar_select %p48, %s49, %s50
      %p54 = pneg %p48
      %p55 = scmp.eq.s32.totalorder %s18, 2
      %p56 = por %p54, %p55
      %p57 = scmp.ne.s32.totalorder %s49, %s52
      %p58 = scmp.eq.s32.totalorder %s18, 0
      %p59 = por %p57, %p58
      %p60 = scmp.ne.s32.totalorder %s49, %s52
      %p61 = scmp.eq.s32.totalorder %s23, 2
      %p62 = por %p60, %p61
      %p63 = scmp.ne.s32.totalorder %s52, %s53
      %p64 = scmp.eq.s32.totalorder %s23, 0
      %p65 = por %p63, %p64
      %p66 = scmp.ne.s32.totalorder %s52, %s53
      %p67 = scmp.eq.s32.totalorder %s24, 2
      %p68 = por %p66, %p67
      %p70 = scmp.ne.s32.totalorder %s53, %s69
      %p71 = scmp.eq.s32.totalorder %s24, 0
      %p72 = por %p70, %p71
      %s73 = ssub.s32 %s25, %s44
      %s74 = ssub.s32 %s27, %s36
      %s75 = sor.u32 %s73, %s74
      %p76 = scmp.eq.s32.totalorder %s75, 0
      %s78 = sadd.s32 %s77, 1
      %s79 = scalar_select %p76, %s77, %s78
      %p82 = pneg %p76
      %p83 = scmp.eq.s32.totalorder %s18, 2
      %p84 = por %p82, %p83
      %p85 = scmp.ne.s32.totalorder %s77, %s80
      %p86 = scmp.eq.s32.totalorder %s18, 0
      %p87 = por %p85, %p86
      %p88 = scmp.ne.s32.totalorder %s77, %s80
      %p89 = scmp.eq.s32.totalorder %s23, 2
      %p90 = por %p88, %p89
      %p91 = scmp.ne.s32.totalorder %s80, %s81
      %p92 = scmp.eq.s32.totalorder %s23, 0
      %p93 = por %p91, %p92
      %p94 = scmp.ne.s32.totalorder %s80, %s81
      %p95 = scmp.eq.s32.totalorder %s24, 2
      %p96 = por %p94, %p95
      %p98 = scmp.ne.s32.totalorder %s81, %s97
      %p99 = scmp.eq.s32.totalorder %s24, 0
      %p100 = por %p98, %p99
      %s101 = ssub.s32 %s25, %s44
      %s102 = ssub.s32 %s27, %s36
      %s103 = sor.u32 %s101, %s102
      %p104 = scmp.eq.s32.totalorder %s103, 0
      %s106 = sadd.s32 %s105, 1
      %s107 = scalar_select %p104, %s105, %s106
      %p110 = pneg %p104
      %p111 = scmp.eq.s32.totalorder %s18, 2
      %p112 = por %p110, %p111
      %p113 = scmp.ne.s32.totalorder %s105, %s108
      %p114 = scmp.eq.s32.totalorder %s18, 0
      %p115 = por %p113, %p114
      %p116 = scmp.ne.s32.totalorder %s105, %s108
      %p117 = scmp.eq.s32.totalorder %s23, 2
      %p118 = por %p116, %p117
      %p119 = scmp.ne.s32.totalorder %s108, %s109
      %p120 = scmp.eq.s32.totalorder %s23, 0
      %p121 = por %p119, %p120
      %p122 = scmp.ne.s32.totalorder %s108, %s109
      %p123 = scmp.eq.s32.totalorder %s24, 2
      %p124 = por %p122, %p123
      %p126 = scmp.ne.s32.totalorder %s109, %s125
      %p127 = scmp.eq.s32.totalorder %s24, 0
      %p128 = por %p126, %p127
      %s129 = ssub.s32 %s25, %s44
      %s130 = ssub.s32 %s26, %s40
      %s131 = sor.u32 %s129, %s130
      %s132 = ssub.s32 %s27, %s36
      %s133 = sor.u32 %s131, %s132
      %p134 = scmp.eq.s32.totalorder %s133, 0
      %s136 = sadd.s32 %s135, 1
      %s137 = scalar_select %p134, %s135, %s136
      %p140 = pneg %p134
      %p141 = scmp.eq.s32.totalorder %s18, 2
      %p142 = por %p140, %p141
      %p143 = scmp.ne.s32.totalorder %s135, %s138
      %p144 = scmp.eq.s32.totalorder %s18, 0
      %p145 = por %p143, %p144
      %p146 = scmp.ne.s32.totalorder %s135, %s138
      %p147 = scmp.eq.s32.totalorder %s23, 2
      %p148 = por %p146, %p147
      %p149 = scmp.ne.s32.totalorder %s138, %s139
      %p150 = scmp.eq.s32.totalorder %s23, 0
      %p151 = por %p149, %p150
      %p152 = scmp.ne.s32.totalorder %s138, %s139
      %p153 = scmp.eq.s32.totalorder %s24, 2
      %p154 = por %p152, %p153
      %p156 = scmp.ne.s32.totalorder %s139, %s155
      %p157 = scmp.eq.s32.totalorder %s24, 0
      %p158 = por %p156, %p157
      %p159 = scmp.le.s32.totalorder 1, %s18
      %p160 = scmp.lt.s32.totalorder %s18, 4
      %p161 = pnand %p159, %p160
      %p162 = pneg %p161
      // Predicated region
      $region9: #{tpu_custom_call.1} parent=5 // pred_check
        _
      $region10: #{tpu_custom_call.1} parent=5 // pred_check_branch
        %164 = sbr.rel (%p161) target = $region12
      $region11: #{tpu_custom_call.1} parent=5 // pred_region
        %s165 = ssub.s32 %s18, 1
      $region12: #{tpu_custom_call.1} parent=5 // pred_fallthru
        _
      %p166 = scmp.lt.s32.totalorder %s18, 3
      // Predicated region
      $region13: #{tpu_custom_call.1} parent=5 // pred_check
        %p167 = pneg %p166
      $region14: #{tpu_custom_call.1} parent=5 // pred_check_branch
        %169 = sbr.rel (%p167) target = $region16
      $region15: #{tpu_custom_call.1} parent=5 // pred_region
        // Predicated region
        $region17: #{tpu_custom_call.1} parent=15 // pred_check
          %p170 = pneg %p59
        $region18: #{tpu_custom_call.1} parent=15 // pred_check_branch
          %172 = sbr.rel (%p170) target = $region20
        $region19: #{tpu_custom_call.1} parent=15 // pred_region
          %s173 = sand.u32 %s49, 1
          %s174 = scalar_lea.sflag [#allocation3], %s173
          %s175 = sand.u32 %s49, 1
          %s176 = smul.addr %s175, 8
          %s177 = scalar_lea.vmem [#allocation2], %s176
          %s178 = smul.u32 2, %s26
          %s180 = ssub.s32 128, 128
          %181 = vsyncadd %s174, %s180
          %s182 = smul.addr %s25, 2
          %s183 = sadd.s32 %s178, %s182
          %s184 = smul.addr %s183, 64
          %s185 = scalar_lea.hbm %s0, %s184
          %s186 = sshll.u32 %s177, 4
          %s187 = int_to_ptr.vmem [resolvable:$true] %s186
          %192 = dma.hbm_to_vmem [thread:$0]  %s185, 128, %s187, %s174, 64, 64, 4
        $region20: #{tpu_custom_call.1} parent=15 // pred_fallthru
          _
        // Predicated region
        $region21: #{tpu_custom_call.1} parent=15 // pred_check
          %p193 = pneg %p87
        $region22: #{tpu_custom_call.1} parent=15 // pred_check_branch
          %195 = sbr.rel (%p193) target = $region24
        $region23: #{tpu_custom_call.1} parent=15 // pred_region
          %s196 = sand.u32 %s77, 1
          %s197 = scalar_lea.sflag [#allocation6], %s196
          %s198 = sand.u32 %s77, 1
          %s199 = smul.addr %s198, 16
          %s200 = scalar_lea.vmem [#allocation5], %s199
          %s202 = ssub.s32 256, 256
          %203 = vsyncadd %s197, %s202
          %s204 = smul.addr %s25, 4
          %s205 = sadd.s32 %s27, %s204
          %s206 = smul.addr %s205, 64
          %s207 = scalar_lea.hbm %s1, %s206
          %s208 = sshll.u32 %s200, 4
          %s209 = int_to_ptr.vmem [resolvable:$true] %s208
          %214 = dma.hbm_to_vmem [thread:$0]  %s207, 256, %s209, %s197, 64, 64, 4
        $region24: #{tpu_custom_call.1} parent=15 // pred_fallthru
          _
        // Predicated region
        $region25: #{tpu_custom_call.1} parent=15 // pred_check
          %p215 = pneg %p115
        $region26: #{tpu_custom_call.1} parent=15 // pred_check_branch
          %217 = sbr.rel (%p215) target = $region28
        $region27: #{tpu_custom_call.1} parent=15 // pred_region
          %p218 = scmp.lt.s32.totalorder %s25, 2
          %s219 = scalar_select %p218, %s25, 2
          %p220 = scmp.lt.s32.totalorder %s27, 0
          %s221 = scalar_select %p220, %s27, 0
          %s222 = sadd.s32 %s221, %s219
          %s223 = scalar_lea.vmem %s2, %s222
        $region28: #{tpu_custom_call.1} parent=15 // pred_fallthru
          _
      $region16: #{tpu_custom_call.1} parent=5 // pred_fallthru
        _
      %p224 = scmp.le.s32.totalorder 1, %s18
      %p225 = scmp.lt.s32.totalorder %s18, 4
      %p226 = pnand %p224, %p225
      %p227 = pneg %p226
      // Predicated region
      $region29: #{tpu_custom_call.1} parent=5 // pred_check
        _
      $region30: #{tpu_custom_call.1} parent=5 // pred_check_branch
        %229 = sbr.rel (%p226) target = $region32
      $region31: #{tpu_custom_call.1} parent=5 // pred_region
        %s230 = ssub.s32 %s18, 1
        %s231 = sand.u32 %s52, 1
        %s232 = scalar_lea.sflag [#allocation3], %s231
        %s233 = sand.u32 %s52, 1
        %s234 = smul.addr %s233, 8
        %s235 = scalar_lea.vmem [#allocation2], %s234
        // Predicated region
        $region33: #{tpu_custom_call.1} parent=31 // pred_check
          %p236 = pneg %p65
        $region34: #{tpu_custom_call.1} parent=31 // pred_check_branch
          %238 = sbr.rel (%p236) target = $region36
        $region35: #{tpu_custom_call.1} parent=31 // pred_region
          %239 = dma.done %s232, 128
        $region36: #{tpu_custom_call.1} parent=31 // pred_fallthru
          _
        %s240 = sand.u32 %s80, 1
        %s241 = scalar_lea.sflag [#allocation6], %s240
        %s242 = sand.u32 %s80, 1
        %s243 = smul.addr %s242, 16
        %s244 = scalar_lea.vmem [#allocation5], %s243
        // Predicated region
        $region37: #{tpu_custom_call.1} parent=31 // pred_check
          %p245 = pneg %p93
        $region38: #{tpu_custom_call.1} parent=31 // pred_check_branch
          %247 = sbr.rel (%p245) target = $region40
        $region39: #{tpu_custom_call.1} parent=31 // pred_region
          %248 = dma.done %s241, 256
        $region40: #{tpu_custom_call.1} parent=31 // pred_fallthru
          _
        %s249 = sand.u32 %s52, 1
        %s250 = scalar_lea.sflag [#allocation3], %s249
        %s251 = sand.u32 %s52, 1
        %s252 = smul.addr %s251, 8
        %s253 = scalar_lea.vmem [#allocation2], %s252
        %p254 = pneg %p65
        %p255 = pneg %p62
        %s256 = sand.u32 %s80, 1
        %s257 = scalar_lea.sflag [#allocation6], %s256
        %s258 = sand.u32 %s80, 1
        %s259 = smul.addr %s258, 16
        %s260 = scalar_lea.vmem [#allocation5], %s259
        %p261 = pneg %p93
        %p262 = pneg %p90
        %p263 = scmp.lt.s32.totalorder %s28, 2
        %s264 = scalar_select %p263, %s28, 2
        %p265 = scmp.lt.s32.totalorder %s30, 0
        %s266 = scalar_select %p265, %s30, 0
        %s267 = sadd.s32 %s266, %s264
        %s268 = scalar_lea.vmem %s2, %s267
        %p269 = pneg %p121
        %p270 = pneg %p118
        %p271 = pneg %p151
        %p272 = pneg %p148
        %s273 = sand.u32 %s138, 1
        %s274 = scalar_lea.sflag [#allocation4], %s273
        %s275 = sand.u32 %s138, 1
        %s276 = smul.addr %s275, 8
        %s277 = scalar_lea.vmem [#allocation7], %s276
        %s278 = smul.u32 2, %s29
        %p279 = scmp.lt.s32.totalorder %s28, 2
        %s280 = scalar_select %p279, %s28, 2
        %p281 = scmp.lt.s32.totalorder %s30, 0
        %s282 = scalar_select %p281, %s30, 0
        %s283 = sadd.s32 %s282, %s280
        %s284 = scalar_lea.vmem %s2, %s283
        %s285 = smul.u32 2, %s29
        %v287 = vld [vmem:[%s235] sm:$0xf]
        %v288 = vld [vmem:[%s235 + $0x4] sm:$0xf]
        %v289 = vld [vmem:[%s244] sm:$0xf]
        %v290 = vld [vmem:[%s244 + $0x4] sm:$0xf]
        %v291 = vld [vmem:[%s244 + $0x8] sm:$0xf]
        %v292 = vld [vmem:[%s244 + $0xc] sm:$0xf]
        %v293 = vld [vmem:[%s284] sm:$0x1]
        %v295 = vlaneseq
        %v296 = vshrl.u32 %v295, 7
        %v297 = vsub.s32 0, %v296
        %v298 = vrot.slane %v293, %v297
        %v302 = vunpack.c.l.b16 %v287
        %v303 = vunpack.c.l.b16 %v288
        %v304 = vpack.c.b16 %v303, %v302
        %v309 = vunpack.c.l.b16 %v289
        %v310 = vunpack.c.l.b16 %v290
        %v311 = vunpack.c.l.b16 %v291
        %v312 = vunpack.c.l.b16 %v292
        %v313 = vpack.c.b16 %v310, %v309
        %v314 = vpack.c.b16 %v312, %v311
        %vm317 = vcmask 261120
        %v319 = vsel %vm317, %v304, 0
        %321 = vmatprep.subr.bf16.mxu0 0
        %322 = vmatpush1.bf16.msra.mxu0 %v313
        %323 = vmatprep.subr.bf16.mxu0 0
        %324 = vmatpush1.bf16.msra.mxu0 %v314
        %325 = vmatprep.subr.bf16.mxu0 0
        %326 = vmatpush1.bf16.msra.mxu0 0
        %327 = vmatprep.subr.bf16.mxu0 0
        %328 = vmatpush1.bf16.msra.mxu0 0
        %329 = vmatprep.subr.bf16.mxu0 0
        %330 = vmatpush1.bf16.msra.mxu0 0
        %331 = vmatprep.subr.bf16.mxu0 0
        %332 = vmatpush1.bf16.msra.mxu0 0
        %333 = vmatprep.subr.bf16.mxu0 0
        %334 = vmatpush1.bf16.msra.mxu0 0
        %335 = vmatprep.subr.bf16.mxu0 0
        %336 = vmatpush1.bf16.msra.mxu0 0
        %337 = vmatprep.subr.bf16.mxu0 0
        %338 = vmatpush1.bf16.msra.mxu0 0
        %339 = vmatprep.subr.bf16.mxu0 0
        %340 = vmatpush1.bf16.msra.mxu0 0
        %341 = vmatprep.subr.bf16.mxu0 0
        %342 = vmatpush1.bf16.msra.mxu0 0
        %343 = vmatprep.subr.bf16.mxu0 0
        %344 = vmatpush1.bf16.msra.mxu0 0
        %345 = vmatprep.subr.bf16.mxu0 0
        %346 = vmatpush1.bf16.msra.mxu0 0
        %347 = vmatprep.subr.bf16.mxu0 0
        %348 = vmatpush1.bf16.msra.mxu0 0
        %349 = vmatprep.subr.bf16.mxu0 0
        %350 = vmatpush1.bf16.msra.mxu0 0
        %351 = vmatprep.subr.bf16.mxu0 0
        %352 = vmatpush1.bf16.msra.mxu0 0
        %353 = vmatprep.mubr.bf16.mxu0 0
        %354 = vmatmul.mubr.bf16.gmra.mrb[0].mxu0 %v319
        %v355 = vpop.f32.mrb[0].mxu0
        %v356 = vadd.f32 %v298, %v355
        %v357 = vpop.f32.mrb[0].mxu0
        %v358 = vpop.f32.mrb[0].mxu0
        %v359 = vadd.f32 %v298, %v358
        %v360 = vpop.f32.mrb[0].mxu0
        %361 = vdwg.mxu0
        %v362 = vpack.c.bf16 %v359, %v356
        %v364 = vunpack.c.l.b16 %v362
        %v365 = vunpack.c.h.b16 %v362
        %v366 = vpack.c.b16 %v364, %v364
        %v367 = vpack.c.b16 %v365, %v365
        %vm370 = vcmask 257024
        %371 = vst.msk [vmem:[%s277] sm:$0xf] %vm370, %v366
        %372 = vst.msk [vmem:[%s277 + $0x4] sm:$0xf] %vm370, %v367
        %s373 = sand.u32 %s138, 1
        %s374 = scalar_lea.sflag [#allocation4], %s373
        %s375 = sand.u32 %s138, 1
        %s376 = smul.addr %s375, 8
        %s377 = scalar_lea.vmem [#allocation7], %s376
        // Predicated region
        $region41: #{tpu_custom_call.1} parent=31 // pred_check
          %p378 = pneg %p148
        $region42: #{tpu_custom_call.1} parent=31 // pred_check_branch
          %380 = sbr.rel (%p378) target = $region44
        $region43: #{tpu_custom_call.1} parent=31 // pred_region
          %s381 = smul.u32 2, %s29
          %s383 = ssub.s32 128, 128
          %384 = vsyncadd %s374, %s383
          %s385 = sadd.s32 %s30, %s381
          %s386 = smul.addr %s28, 2
          %s387 = sadd.s32 %s385, %s386
          %s388 = smul.addr %s387, 64
          %s389 = scalar_lea.hbm %s3, %s388
          %s390 = sshll.u32 %s377, 4
          %s391 = int_to_ptr.vmem [resolvable:$true] %s390
          %396 = dma.vmem_to_hbm [thread:$0]  %s391, 128, %s389, %s374, 64, 64, 4
        $region44: #{tpu_custom_call.1} parent=31 // pred_fallthru
          _
      $region32: #{tpu_custom_call.1} parent=5 // pred_fallthru
        _
      %p397 = scmp.le.s32.totalorder 2, %s18
      // Predicated region
      $region45: #{tpu_custom_call.1} parent=5 // pred_check
        %p398 = pneg %p397
      $region46: #{tpu_custom_call.1} parent=5 // pred_check_branch
        %400 = sbr.rel (%p398) target = $region48
      $region47: #{tpu_custom_call.1} parent=5 // pred_region
        %s401 = ssub.s32 %s18, 2
        // Predicated region
        $region49: #{tpu_custom_call.1} parent=47 // pred_check
          %p402 = pneg %p154
        $region50: #{tpu_custom_call.1} parent=47 // pred_check_branch
          %404 = sbr.rel (%p402) target = $region52
        $region51: #{tpu_custom_call.1} parent=47 // pred_region
          %s405 = sand.u32 %s139, 1
          %s406 = scalar_lea.sflag [#allocation4], %s405
          %s407 = sand.u32 %s139, 1
          %s408 = smul.addr %s407, 8
          %s409 = scalar_lea.vmem [#allocation7], %s408
          %410 = dma.done %s406, 128
        $region52: #{tpu_custom_call.1} parent=47 // pred_fallthru
          _
      $region48: #{tpu_custom_call.1} parent=5 // pred_fallthru
        _
    $region6: #{tpu_custom_call.1} parent=1 // loop_footer
      %s22 = sadd.s32 1, %s18
    $region7: #{tpu_custom_call.1} parent=1 // loop_footer_branch
      %17 = sbr.rel target = $region3
    $region8: #{tpu_custom_call.1} parent=1 // loop_exit
      _
    %411 = vsyncpa [#allocation3], 1
    %s412 = scalar_lea.sflag [#allocation3], 1
    %413 = vsyncpa %s412, 1
    %414 = vsyncpa [#allocation6], 1
    %s415 = scalar_lea.sflag [#allocation6], 1
    %416 = vsyncpa %s415, 1
    %417 = vsyncpa [#allocation4], 1
    %s418 = scalar_lea.sflag [#allocation4], 1
    %419 = vsyncpa %s418, 1

</llo_original>
